<compile_context>
chip_gen: v7x
topology: tpu7x:2x2x1
jax: 0.10.0
libtpu: 0.0.40
codegen_flags: <defaults>
</compile_context>

<pallas_src>
import jax
import jax.numpy as jnp
from jax.experimental import pallas as pl
from jax.experimental.pallas import tpu as pltpu


def _loss_kernel(x_ref, dwq_ref, sign_ref, db_ref, out_ref):
    # x_ref:    (1, TB, 128) input rows (f32 or bf16, fed straight to the MXU)
    # dwq_ref:  (1, 8, 128)  same dtype as x; row 0 = w[1]-w[0], rows 1..7 = 0
    # sign_ref: (1, TB)      f32, +1 (label 0) / -1 (label 1) / 0 (padding row)
    # db_ref:   (1, 1)       f32 SMEM, b[1]-b[0]
    # out_ref:  (1, 1)       f32 per-core partial sum of row losses; resident
    #                        across the inner "arbitrary" grid axis
    i = pl.program_id(1)

    @pl.when(i == 0)
    def _init():
        out_ref[...] = jnp.zeros_like(out_ref)

    x = x_ref[...]                         # no in-kernel upcast: MXU takes bf16 natively
    dwq = dwq_ref[...]                     # (1, 8, 128)
    sign = sign_ref[...]                   # (1, TB)
    db = db_ref[0, 0]

    # (1,8,F) x (1,TB,F) -> (1,8,TB), f32 accumulation; batch lands on lanes.
    s = jnp.einsum("bqd,bkd->bqk", dwq, x, preferred_element_type=jnp.float32)
    # Rows 1..7 of dwq are structurally zero -> just extract sublane 0
    # (cheaper than a cross-sublane XLU reduce).
    d = s[:, 0, :] + db                    # (1, TB): logit[1] - logit[0] per row

    # Numerically stable softplus(sign * d) == per-row 2-class cross entropy.
    # Garbage rows from ragged / phantom tiles may be NaN/Inf here; the select
    # below (sign == 0 sentinel) drops them without arithmetic on masked values.
    t = sign * d
    sp = jnp.maximum(t, 0.0) + jnp.log(1.0 + jnp.exp(-jnp.abs(t)))
    sp = jnp.where(sign != 0.0, sp, 0.0)

    out_ref[...] += jnp.sum(sp, axis=1, keepdims=True)


def _round_up(n, m):
    return ((n + m - 1) // m) * m


def loss_v_forward(x, labels, weight, bias, *, tb_max=8192):
    """Mean 2-class cross-entropy of Linear(128, 2)(x.squeeze(1)) vs labels.

    x: (B, 1, 128) (or (B, 128)), float32 or bfloat16
    labels: (B,) int, values in {0, 1}
    weight: (2, 128), bias: (2,)  -- torch.nn.Linear convention
    tb_max: max batch-rows per tile (rounded down to a multiple of 128).
            8192 (4 MiB f32 / 2 MiB bf16 per buffer, double-buffered) fits all
            of v5e/v6e/v7x; bump to 16384 for bf16 on v6e/v7x if desired.
    """
    B = x.shape[0]
    F = x.shape[-1]
    x2 = x.reshape(1, B, F)                          # squeeze(1) + unit batch dim: free
    if x2.dtype not in (jnp.float32, jnp.bfloat16):
        x2 = x2.astype(jnp.float32)

    w = weight.astype(jnp.float32)
    b = bias.astype(jnp.float32)
    dw = w[1] - w[0]                                 # (128,)
    db = (b[1] - b[0]).reshape(1, 1)                 # (1, 1) -> SMEM scalar
    # Row 0 = dw, rows 1..7 zero; cast to x dtype so the MXU runs the native
    # matmul (no in-kernel f32 upcast copy of the big tile).
    dwq = jnp.zeros((1, 8, F), jnp.float32).at[0, 0, :].set(dw).astype(x2.dtype)

    # +1 for label 0, -1 for label 1; padded / phantom rows get 0 (kernel mask).
    sign = 1.0 - 2.0 * labels.astype(jnp.float32)    # (B,)

    # Tile choice: one sublane-aligned tile when the whole batch fits, else
    # tb_max-row tiles (multiple of 128).
    tb_max = max(128, (tb_max // 128) * 128)
    TB = _round_up(B, 8) if B <= tb_max else tb_max
    g = pl.cdiv(B, TB)                               # real tiles
    NC = 2 if g >= 2 else 1                          # TensorCore split (v7x); harmless on 1-TC chips
    g_per = pl.cdiv(g, NC)                           # tiles per core

    # x is NOT padded (no extra HBM pass). Only the tiny sign vector is padded
    # with zeros so every (phantom / ragged) tile has a fully defined mask.
    B_sign = NC * g_per * TB
    if B_sign != B:
        sign = jnp.pad(sign, ((0, B_sign - B),))
    sign2 = sign.reshape(1, B_sign)

    # Clamp the x tile index so the phantom tile (odd tile count split over two
    # cores) re-reads a real tile instead of going fully out of bounds; its sign
    # rows are all zero so it contributes nothing to the sum.
    x_map = lambda c, i: (0, jnp.minimum(c * g_per + i, g - 1), 0)

    grid_spec = pltpu.PrefetchScalarGridSpec(
        num_scalar_prefetch=0,
        grid=(NC, g_per),
        in_specs=[
            pl.BlockSpec((1, TB, F), x_map),                         # x tile
            pl.BlockSpec((1, 8, F), lambda c, i: (0, 0, 0)),         # dw rows (constant)
            pl.BlockSpec((1, TB), lambda c, i: (0, c * g_per + i)),  # sign tile
            pl.BlockSpec(memory_space=pltpu.MemorySpace.SMEM),       # db scalar
        ],
        out_specs=pl.BlockSpec((1, 1), lambda c, i: (c, 0)),         # per-core partial sum
    )

    itemsize = jnp.dtype(x2.dtype).itemsize
    cost = pl.CostEstimate(
        flops=2 * B * F * 8,
        transcendentals=2 * B,
        bytes_accessed=B * F * itemsize + B_sign * 4 + 8 * F * itemsize + NC * 4 + 4,
    )

    out = pl.pallas_call(
        _loss_kernel,
        out_shape=jax.ShapeDtypeStruct((NC, 1), jnp.float32),
        grid_spec=grid_spec,
        compiler_params=pltpu.CompilerParams(
            dimension_semantics=("parallel", "arbitrary")),
        cost_estimate=cost,
    )(x2, dwq, sign2, db)

    # Sum the per-core partials and take the batch mean over the TRUE B.
    return jnp.sum(out) / B


def _reference_loss(x, labels, weight, bias):
    x2 = x.reshape(x.shape[0], x.shape[-1]).astype(jnp.float32)
    logits = x2 @ weight.T.astype(jnp.float32) + bias.astype(jnp.float32)
    logp = jax.nn.log_softmax(logits, axis=-1)
    nll = -jnp.take_along_axis(logp, labels.reshape(-1, 1), axis=-1)
    return jnp.mean(nll)


if __name__ == "__main__":
    key = jax.random.PRNGKey(0)
    k_x, k_lab, k_w, k_b, k_x2, k_lab2, k_x3, k_lab3 = jax.random.split(key, 8)

    F_IN, F_OUT = 128, 2
    # Deterministic init mimicking torch.nn.Linear(128, 2): U(-1/sqrt(fan_in), +).
    bound = 1.0 / (F_IN ** 0.5)
    weight = jax.random.uniform(k_w, (F_OUT, F_IN), jnp.float32, -bound, bound)
    bias = jax.random.uniform(k_b, (F_OUT,), jnp.float32, -bound, bound)

    # Case 1: small batch, single exact tile (the module's natural shapes).
    B1 = 8
    x1 = jax.random.normal(k_x, (B1, 1, F_IN), jnp.float32)
    lab1 = jax.random.randint(k_lab, (B1,), 0, F_OUT, dtype=jnp.int32)
    loss1 = loss_v_forward(x1, lab1, weight, bias)
    jax.block_until_ready(loss1)
    ref1 = _reference_loss(x1, lab1, weight, bias)
    assert jnp.allclose(loss1, ref1, atol=1e-5, rtol=1e-5), (loss1, ref1)

    # Case 2: multi-tile grid, 2-core split with an odd tile count (phantom tile,
    # clamped x index) and a ragged last tile with NO x padding.
    B2 = 300
    x2 = jax.random.normal(k_x2, (B2, 1, F_IN), jnp.float32)
    lab2 = jax.random.randint(k_lab2, (B2,), 0, F_OUT, dtype=jnp.int32)
    loss2 = loss_v_forward(x2, lab2, weight, bias, tb_max=128)
    jax.block_until_ready(loss2)
    ref2 = _reference_loss(x2, lab2, weight, bias)
    assert jnp.allclose(loss2, ref2, atol=1e-5, rtol=1e-5), (loss2, ref2)

    # Case 3: bf16 input fed straight to the MXU (no in-kernel upcast), even
    # tile split + ragged last tile. Looser tolerance: dw is rounded to bf16.
    B3 = 200
    x3 = jax.random.normal(k_x3, (B3, 1, F_IN), jnp.float32).astype(jnp.bfloat16)
    lab3 = jax.random.randint(k_lab3, (B3,), 0, F_OUT, dtype=jnp.int32)
    loss3 = loss_v_forward(x3, lab3, weight, bias, tb_max=128)
    jax.block_until_ready(loss3)
    ref3 = _reference_loss(x3, lab3, weight, bias)
    assert jnp.allclose(loss3, ref3, atol=2e-2, rtol=2e-2), (loss3, ref3)

    print("KERNEL_OK")
</pallas_src>

<mosaic_0001>
module attributes {stable_mosaic.version = 11 : i64} {
  func.func @_loss_kernel(%arg0: i32, %arg1: i32, %arg2: memref<1x8x128xf32, #tpu.memory_space<vmem>>, %arg3: memref<1x8x128xf32, #tpu.memory_space<vmem>>, %arg4: memref<1x8xf32, #tpu.memory_space<vmem>>, %arg5: memref<1x1xf32, #tpu.memory_space<smem>>, %arg6: memref<1x1xf32, #tpu.memory_space<vmem>>) attributes {dimension_semantics = [#tpu.dimension_semantics<parallel>, #tpu.dimension_semantics<arbitrary>], iteration_bounds = array<i64: 1, 1>, scalar_prefetch = 0 : i64, scratch_operands = 0 : i64, tpu.core_type = #tpu.core_type<tc>, window_params = [{transform_indices = @transform_0, window_bounds = array<i64: 1, 8, 128>}, {pipeline_mode = #tpu.pipeline_mode<synchronous>, transform_indices = @transform_1, window_bounds = array<i64: 1, 8, 128>}, {transform_indices = @transform_2, window_bounds = array<i64: 1, 8>}, {transform_indices = @transform_3, window_bounds = array<i64: 1, 1>}, {transform_indices = @transform_4, window_bounds = array<i64: 1, 1>}]} {
    %c0_i32 = arith.constant 0 : i32
    %0 = arith.cmpi eq, %arg1, %c0_i32 : i32
    %1 = arith.extui %0 : i1 to i32
    %c0_i32_0 = arith.constant 0 : i32
    %2 = arith.cmpi ne, %1, %c0_i32_0 : i32
    scf.if %2 {
      %cst_20 = arith.constant 0.000000e+00 : f32
      %32 = vector.broadcast %cst_20 : f32 to vector<1x1xf32>
      %c0_21 = arith.constant 0 : index
      %c0_22 = arith.constant 0 : index
      %33 = vector.load %arg6[%c0_21, %c0_22] : memref<1x1xf32, #tpu.memory_space<vmem>>, vector<1x1xf32>
      tpu.vector_store %arg6[%c0_21, %c0_22], %32 {strides = array<i32>} : memref<1x1xf32, #tpu.memory_space<vmem>>, vector<1x1xf32>,
    } else {
    }
    %c0 = arith.constant 0 : index
    %c0_1 = arith.constant 0 : index
    %c0_2 = arith.constant 0 : index
    %3 = vector.load %arg2[%c0, %c0_1, %c0_2] : memref<1x8x128xf32, #tpu.memory_space<vmem>>, vector<1x8x128xf32>
    %c0_3 = arith.constant 0 : index
    %c0_4 = arith.constant 0 : index
    %c0_5 = arith.constant 0 : index
    %4 = vector.load %arg3[%c0_3, %c0_4, %c0_5] : memref<1x8x128xf32, #tpu.memory_space<vmem>>, vector<1x8x128xf32>
    %c0_6 = arith.constant 0 : index
    %c0_7 = arith.constant 0 : index
    %5 = vector.load %arg4[%c0_6, %c0_7] : memref<1x8xf32, #tpu.memory_space<vmem>>, vector<1x8xf32>
    %c0_8 = arith.constant 0 : index
    %c0_9 = arith.constant 0 : index
    %6 = memref.load %arg5[%c0_8, %c0_9] : memref<1x1xf32, #tpu.memory_space<smem>>
    "tpu.trace_start"() <{level = 10 : i32, message = "bqd,bkd->bqk"}> : () -> ()
    %cst = arith.constant dense<0.000000e+00> : vector<1x8x8xf32>
    %7 = tpu.matmul %4, %3, %cst {dimension_numbers = #tpu.dot_dimension_numbers<[2], [2], [1], [1], [0, 0, 0, 1, 1, 1], [0], [0]>} : vector<1x8x128xf32>, vector<1x8x128xf32>, vector<1x8x8xf32> -> vector<1x8x8xf32>
    "tpu.trace_stop"() : () -> ()
    %8 = vector.extract_strided_slice %7 {offsets = [0, 0, 0], sizes = [1, 1, 8], strides = [1, 1, 1]} : vector<1x8x8xf32> to vector<1x1x8xf32>
    %9 = vector.shape_cast %8 : vector<1x1x8xf32> to vector<1x8xf32>
    %10 = vector.broadcast %6 : f32 to vector<1x8xf32>
    %11 = arith.addf %9, %10 : vector<1x8xf32>
    %12 = arith.mulf %5, %11 : vector<1x8xf32>
    %cst_10 = arith.constant 0.000000e+00 : f32
    %13 = vector.broadcast %cst_10 : f32 to vector<1x8xf32>
    %14 = arith.maximumf %12, %13 : vector<1x8xf32>
    %15 = math.absf %12 : vector<1x8xf32>
    %cst_11 = arith.constant 0.000000e+00 : f32
    %16 = vector.broadcast %cst_11 : f32 to vector<1x8xf32>
    %17 = arith.subf %16, %15 : vector<1x8xf32>
    %18 = math.exp %17 : vector<1x8xf32>
    %cst_12 = arith.constant 1.000000e+00 : f32
    %19 = vector.broadcast %cst_12 : f32 to vector<1x8xf32>
    %20 = arith.addf %19, %18 : vector<1x8xf32>
    %21 = math.log %20 : vector<1x8xf32>
    %22 = arith.addf %14, %21 : vector<1x8xf32>
    %cst_13 = arith.constant 0.000000e+00 : f32
    %23 = vector.broadcast %cst_13 : f32 to vector<1x8xf32>
    %24 = arith.cmpf one, %5, %23 : vector<1x8xf32>
    %cst_14 = arith.constant 0.000000e+00 : f32
    %25 = vector.broadcast %cst_14 : f32 to vector<1x8xf32>
    %26 = arith.select %24, %22, %25 : vector<1x8xi1>, vector<1x8xf32>
    %c0_15 = arith.constant 0 : index
    %c0_16 = arith.constant 0 : index
    %27 = vector.load %arg6[%c0_15, %c0_16] : memref<1x1xf32, #tpu.memory_space<vmem>>, vector<1x1xf32>
    %cst_17 = arith.constant dense<0.000000e+00> : vector<1xf32>
    %28 = vector.multi_reduction <add>, %26, %cst_17 [1] : vector<1x8xf32> to vector<1xf32>
    %29 = vector.shape_cast %28 : vector<1xf32> to vector<1x1xf32>
    %30 = arith.addf %27, %29 : vector<1x1xf32>
    %c0_18 = arith.constant 0 : index
    %c0_19 = arith.constant 0 : index
    %31 = vector.load %arg6[%c0_18, %c0_19] : memref<1x1xf32, #tpu.memory_space<vmem>>, vector<1x1xf32>
    tpu.vector_store %arg6[%c0_18, %c0_19], %30 {strides = array<i32>} : memref<1x1xf32, #tpu.memory_space<vmem>>, vector<1x1xf32>,
    return
  }
  func.func @transform_0(%arg0: i32, %arg1: i32) -> (i32, i32, i32) {
    %c1_i32 = arith.constant 1 : i32
    %0 = arith.muli %arg0, %c1_i32 : i32
    %1 = arith.addi %0, %arg1 : i32
    %c0_i32 = arith.constant 0 : i32
    %2 = arith.minsi %1, %c0_i32 : i32
    %c0_i32_0 = arith.constant 0 : i32
    %c0_i32_1 = arith.constant 0 : i32
    %c0_i32_2 = arith.constant 0 : i32
    return %c0_i32_0, %2, %c0_i32_1 : i32, i32, i32
  }
  func.func @transform_1(%arg0: i32, %arg1: i32) -> (i32, i32, i32) {
    %c0_i32 = arith.constant 0 : i32
    %c0_i32_0 = arith.constant 0 : i32
    %c0_i32_1 = arith.constant 0 : i32
    %c0_i32_2 = arith.constant 0 : i32
    return %c0_i32, %c0_i32_0, %c0_i32_1 : i32, i32, i32
  }
  func.func @transform_2(%arg0: i32, %arg1: i32) -> (i32, i32) {
    %c1_i32 = arith.constant 1 : i32
    %0 = arith.muli %arg0, %c1_i32 : i32
    %1 = arith.addi %0, %arg1 : i32
    %c0_i32 = arith.constant 0 : i32
    %c0_i32_0 = arith.constant 0 : i32
    return %c0_i32, %1 : i32, i32
  }
  func.func @transform_3(%arg0: i32, %arg1: i32) -> (i32, i32) {
    %c0_i32 = arith.constant 0 : i32
    %c0_i32_0 = arith.constant 0 : i32
    %c0_i32_1 = arith.constant 0 : i32
    return %c0_i32, %c0_i32_0 : i32, i32
  }
  func.func @transform_4(%arg0: i32, %arg1: i32) -> (i32, i32) {
    %c0_i32 = arith.constant 0 : i32
    %c0_i32_0 = arith.constant 0 : i32
    return %arg0, %c0_i32 : i32, i32
  }
}

</mosaic_0001>

<llo_original>
// kernel: tpu_custom_call.1
$region0: #{tpu_custom_call.1}
  #allocation0 [shape = 'u32[]', space=smem, size = 0x4, offset = 0x4, fixed_abs, tag = 'smem constant byte address 0x4 - core index']
  #allocation1 [shape = 'u32[144,128]{1,0:T(1,128)}', space=vmem, size = 0x12000, scoped, tag = 'internal scratch']
  #allocation2 [shape = 'f32[1,1]{1,0:T(1,128)S(6)}', space=smem, size = 0x200, scoped, tag = 'scoped memory for tpu_custom_call.1']
  %s0 = inlined_call_operand.hbm [shape: f32[1,8,128], index: 0, kind: input, shape index: {}]
  %s1 = inlined_call_operand.hbm [shape: f32[1,8,128], index: 1, kind: input, shape index: {}]
  %s2 = inlined_call_operand.vmem [shape: f32[1,8], index: 2, kind: input, shape index: {}]
  %s3 = inlined_call_operand.<no memory space> [shape: f32[1,1], index: 3, kind: input, shape index: {}]
  %s4 = inlined_call_operand.hbm [shape: f32[1,1], index: 4, kind: output, shape index: {}]
  %s5 = sld [smem:[#allocation0]]
  $region38: #{tpu_custom_call.1} parent=0
    _
  %s7 = ssub.s32 1, %s5
  %s8 = scalar_select 0, %s7, %s5
  %9 = sst [smem:[#allocation2]] %s3
  $region1: #{tpu_custom_call.1} parent=0
    #allocation3 [shape = 'u8[4096]{0}', space=vmem, size = 0x1000, scoped, tag = 'input window, operand 0, single buffered']
    #allocation4 [shape = 's32[1]{0}', space=sflag, size = 0x4, scoped, tag = 'scoped memory for tpu_custom_call.1']
    #allocation5 [shape = 's32[1]{0}', space=sflag, size = 0x4, scoped, tag = 'scoped memory for tpu_custom_call.1']
    #allocation6 [shape = 'u8[4096]{0}', space=vmem, size = 0x1000, scoped, tag = 'input window, operand 1, single buffered']
    #allocation7 [shape = 's32[1]{0}', space=sflag, size = 0x4, scoped, tag = 'scoped memory for tpu_custom_call.1']
    #allocation8 [shape = 'u8[512]{0}', space=vmem, size = 0x400, scoped, tag = 'output window, operand 0, single buffered']
    %10 = vsyncpa [#allocation4], 0
    %11 = vsyncpa [#allocation7], 0
    %12 = vsyncpa [#allocation5], 0
    // Predicated region
    $region2: #{tpu_custom_call.1} parent=1 // pred_check
      _
    $region3: #{tpu_custom_call.1} parent=1 // pred_check_branch
      %14 = sbr.rel (0) target = $region5
    $region4: #{tpu_custom_call.1} parent=1 // pred_region
      %s15 = sadd.s32 0, 0
      %p16 = scmp.lt.s32.totalorder %s15, 0
      %s17 = scalar_select %p16, %s15, 0
      %s19 = ssub.s32 128, 128
      %20 = vsyncadd [#allocation4], %s19
      %s21 = smul.addr %s17, 128
      %s22 = scalar_lea.hbm %s0, %s21
      %s24 = sshll.u32 [#allocation3], 4
      %s25 = int_to_ptr.vmem [resolvable:$true] %s24
      %27 = dma.hbm_to_vmem [thread:$0]  %s22, 128, %s25, [#allocation4]
    $region5: #{tpu_custom_call.1} parent=1 // pred_fallthru
      _
    // Predicated region
    $region6: #{tpu_custom_call.1} parent=1 // pred_check
      _
    $region7: #{tpu_custom_call.1} parent=1 // pred_check_branch
      %29 = sbr.rel (0) target = $region9
    $region8: #{tpu_custom_call.1} parent=1 // pred_region
      %s31 = ssub.s32 128, 128
      %32 = vsyncadd [#allocation7], %s31
      %s34 = sshll.u32 [#allocation6], 4
      %s35 = int_to_ptr.vmem [resolvable:$true] %s34
      %37 = dma.hbm_to_vmem [thread:$0]  %s1, 128, %s35, [#allocation7]
    $region9: #{tpu_custom_call.1} parent=1 // pred_fallthru
      _
    // Predicated region
    $region10: #{tpu_custom_call.1} parent=1 // pred_check
      _
    $region11: #{tpu_custom_call.1} parent=1 // pred_check_branch
      %39 = sbr.rel (0) target = $region13
    $region12: #{tpu_custom_call.1} parent=1 // pred_region
      %s40 = sadd.s32 0, 0
      %p41 = scmp.lt.s32.totalorder %s40, 0
      %s42 = scalar_select %p41, %s40, 0
      %s43 = scalar_lea.vmem %s2, %s42
      %s44 = sadd.s32 0, 0
    $region13: #{tpu_custom_call.1} parent=1 // pred_fallthru
      _
    // Predicated region
    $region14: #{tpu_custom_call.1} parent=1 // pred_check
      _
    $region15: #{tpu_custom_call.1} parent=1 // pred_check_branch
      %46 = sbr.rel (0) target = $region17
    $region16: #{tpu_custom_call.1} parent=1 // pred_region
      _
    $region17: #{tpu_custom_call.1} parent=1 // pred_fallthru
      _
    // Predicated region
    $region18: #{tpu_custom_call.1} parent=1 // pred_check
      _
    $region19: #{tpu_custom_call.1} parent=1 // pred_check_branch
      %48 = sbr.rel (0) target = $region21
    $region20: #{tpu_custom_call.1} parent=1 // pred_region
      %49 = dma.done [#allocation4], 128
    $region21: #{tpu_custom_call.1} parent=1 // pred_fallthru
      _
    // Predicated region
    $region22: #{tpu_custom_call.1} parent=1 // pred_check
      _
    $region23: #{tpu_custom_call.1} parent=1 // pred_check_branch
      %51 = sbr.rel (0) target = $region25
    $region24: #{tpu_custom_call.1} parent=1 // pred_region
      %52 = dma.done [#allocation7], 128
    $region25: #{tpu_custom_call.1} parent=1 // pred_fallthru
      _
    %s53 = sadd.s32 0, 0
    %p54 = scmp.lt.s32.totalorder %s53, 0
    %s55 = scalar_select %p54, %s53, 0
    %s56 = scalar_lea.vmem %s2, %s55
    %s57 = sadd.s32 0, 0
    %p58 = scmp.lt.s32.totalorder %s57, 0
    %s59 = scalar_select %p58, %s57, 0
    %s60 = sadd.s32 0, 0
    %p61 = scmp.lt.s32.totalorder %s60, 0
    %s62 = scalar_select %p61, %s60, 0
    %s63 = scalar_lea.vmem %s2, %s62
    %s64 = sadd.s32 0, 0
    %p65 = scmp.eq.s32.totalorder 0, 0
    // Predicated region
    $region26: #{tpu_custom_call.1} parent=1 // pred_check
      %p66 = pneg %p65
    $region27: #{tpu_custom_call.1} parent=1 // pred_check_branch
      %68 = sbr.rel (%p66) target = $region29
    $region28: #{tpu_custom_call.1} parent=1 // pred_region
      %vm69 = vcmask 0
      %70 = vst.msk [vmem:[#allocation8] sm:$0x1] %vm69, 0.0
    $region29: #{tpu_custom_call.1} parent=1 // pred_fallthru
      _
    %v71 = vld [vmem:[#allocation3] sm:$0xff]
    %v72 = vld [vmem:[#allocation6] sm:$0xff]
    %v73 = vld [vmem:[%s63] sm:$0x1]
    %s74 = sld [smem:[#allocation2]]
    %75 = vmatprep.subr.mxu0 0.0
    %76 = vmatpush1.xpose.msra.mxu0 %v71
    %77 = vmatprep.subr.mxu0 0.0
    %78 = vmatpush1.xpose.msra.mxu0 0.0
    %79 = vmatprep.subr.mxu0 0.0
    %80 = vmatpush1.xpose.msra.mxu0 0.0
    %81 = vmatprep.subr.mxu0 0.0
    %82 = vmatpush1.xpose.msra.mxu0 0.0
    %83 = vmatprep.subr.mxu0 0.0
    %84 = vmatpush1.xpose.msra.mxu0 0.0
    %85 = vmatprep.subr.mxu0 0.0
    %86 = vmatpush1.xpose.msra.mxu0 0.0
    %87 = vmatprep.subr.mxu0 0.0
    %88 = vmatpush1.xpose.msra.mxu0 0.0
    %89 = vmatprep.subr.mxu0 0.0
    %90 = vmatpush1.xpose.msra.mxu0 0.0
    %91 = vmatprep.subr.mxu0 0.0
    %92 = vmatpush1.xpose.msra.mxu0 0.0
    %93 = vmatprep.subr.mxu0 0.0
    %94 = vmatpush1.xpose.msra.mxu0 0.0
    %95 = vmatprep.subr.mxu0 0.0
    %96 = vmatpush1.xpose.msra.mxu0 0.0
    %97 = vmatprep.subr.mxu0 0.0
    %98 = vmatpush1.xpose.msra.mxu0 0.0
    %99 = vmatprep.subr.mxu0 0.0
    %100 = vmatpush1.xpose.msra.mxu0 0.0
    %101 = vmatprep.subr.mxu0 0.0
    %102 = vmatpush1.xpose.msra.mxu0 0.0
    %103 = vmatprep.subr.mxu0 0.0
    %104 = vmatpush1.xpose.msra.mxu0 0.0
    %105 = vmatprep.subr.mxu0 0.0
    %106 = vmatpush1.xpose.msra.mxu0 0.0
    %107 = vmatprep.subr.mxu0 0.0
    %108 = vmatpush1.xpose.msra.mxu0 0.0
    %109 = vmatprep.subr.mxu0 0.0
    %110 = vmatpush1.xpose.msra.mxu0 0.0
    %111 = vmatprep.subr.mxu0 0.0
    %112 = vmatpush1.xpose.msra.mxu0 0.0
    %113 = vmatprep.subr.mxu0 0.0
    %114 = vmatpush1.xpose.msra.mxu0 0.0
    %115 = vmatprep.subr.mxu0 0.0
    %116 = vmatpush1.xpose.msra.mxu0 0.0
    %117 = vmatprep.subr.mxu0 0.0
    %118 = vmatpush1.xpose.msra.mxu0 0.0
    %119 = vmatprep.subr.mxu0 0.0
    %120 = vmatpush1.xpose.msra.mxu0 0.0
    %121 = vmatprep.subr.mxu0 0.0
    %122 = vmatpush1.xpose.msra.mxu0 0.0
    %123 = vmatprep.subr.mxu0 0.0
    %124 = vmatpush1.xpose.msra.mxu0 0.0
    %125 = vmatprep.subr.mxu0 0.0
    %126 = vmatpush1.xpose.msra.mxu0 0.0
    %127 = vmatprep.subr.mxu0 0.0
    %128 = vmatpush1.xpose.msra.mxu0 0.0
    %129 = vmatprep.subr.mxu0 0.0
    %130 = vmatpush1.xpose.msra.mxu0 0.0
    %131 = vmatprep.subr.mxu0 0.0
    %132 = vmatpush1.xpose.msra.mxu0 0.0
    %133 = vmatprep.subr.mxu0 0.0
    %134 = vmatpush1.xpose.msra.mxu0 0.0
    %135 = vmatprep.subr.mxu0 0.0
    %136 = vmatpush1.xpose.msra.mxu0 0.0
    %137 = vmatprep.subr.mxu0 0.0
    %138 = vmatpush1.xpose.msra.mxu0 0.0
    %139 = vmatprep.mubr.f32.mxu0 0.0
    %140 = vmatmul.mubr.f32.gmra.mrb[0].mxu0 %v72
    %v141 = vpop.f32.mrb[0].mxu0
    %v142 = vadd.f32 0.0, %v141
    %v143 = vpop.f32.mrb[0].mxu0
    %144 = vdwg.mxu0
    %v145 = vstv %s74
    %v146 = vadd.f32 %v142, %v145
    %v147 = vmul.f32 %v73, %v146
    %v148 = vmax.f32 %v147, 0.0
    %v149 = vand.u32 2147483647, %v147
    %v150 = vsub.f32 0.0, %v149
    %v151 = vmul.f32 %v150, 1.442695
    %v152 = vpow.pop %v151
    %v153 = vadd.f32 %v152, 1.0
    %v154 = vlog2.pop %v153
    %v155 = vmul.f32 %v154, 0.6931472
    %v156 = vadd.f32 %v148, %v155
    %vm157 = vcmp.ne.f32.partialorder %v73, 0.0
    %v158 = vsel %vm157, %v156, 0.0
    %v159 = vld [vmem:[#allocation8] sm:$0x1]
    %vm160 = vcmask 57344
    %v161 = vsel %vm160, %v158, 0.0
    %162 = vadd.xlane.f32.xlu0 %v161
    %v163 = vpop.xlane.xlu0 %162
    %v164 = vadd.f32 %v159, %v163
    %vm165 = vcmask 0
    %166 = vst.msk [vmem:[#allocation8] sm:$0x1] %vm165, %v164
    // Predicated region
    $region30: #{tpu_custom_call.1} parent=1 // pred_check
      _
    $region31: #{tpu_custom_call.1} parent=1 // pred_check_branch
      %168 = sbr.rel (0) target = $region33
    $region32: #{tpu_custom_call.1} parent=1 // pred_region
      %s170 = ssub.s32 16, 16
      %171 = vsyncadd [#allocation5], %s170
      %s173 = sshll.u32 [#allocation8], 4
      %s174 = int_to_ptr.vmem [resolvable:$true] %s173
      %176 = dma.vmem_to_hbm [thread:$0]  %s174, 16, %s4, [#allocation5]
    $region33: #{tpu_custom_call.1} parent=1 // pred_fallthru
      _
    // Predicated region
    $region34: #{tpu_custom_call.1} parent=1 // pred_check
      _
    $region35: #{tpu_custom_call.1} parent=1 // pred_check_branch
      %178 = sbr.rel (0) target = $region37
    $region36: #{tpu_custom_call.1} parent=1 // pred_region
      %179 = dma.done [#allocation5], 16
    $region37: #{tpu_custom_call.1} parent=1 // pred_fallthru
      _
    %180 = vsyncpa [#allocation4], 1
    %181 = vsyncpa [#allocation7], 1
    %182 = vsyncpa [#allocation5], 1

</llo_original>
